<compile_context>
chip_gen: v6e
topology: v6e:2x2x1
jax: 0.10.0
libtpu: 0.0.40
codegen_flags: <defaults>
</compile_context>

<pallas_src>
import functools

import jax
import jax.numpy as jnp
import numpy as np
from jax.experimental import pallas as pl
from jax.experimental.pallas import tpu as pltpu


# ----------------------------------------------------------------------------
# small helpers
# ----------------------------------------------------------------------------
def _round_up(x, m):
    return (x + m - 1) // m * m


# ----------------------------------------------------------------------------
# Pallas kernel 1: tiled MXU matmul (used by every conv via im2col)
# ----------------------------------------------------------------------------
def _matmul_kernel(a_ref, b_ref, o_ref):
    o_ref[...] = jnp.dot(a_ref[...], b_ref[...],
                         preferred_element_type=jnp.float32)


@functools.lru_cache(maxsize=None)
def _get_matmul_fn(m_pad, k, n_pad, tm):
    fn = pl.pallas_call(
        _matmul_kernel,
        out_shape=jax.ShapeDtypeStruct((m_pad, n_pad), jnp.float32),
        grid_spec=pltpu.PrefetchScalarGridSpec(
            num_scalar_prefetch=0,
            grid=(m_pad // tm,),
            in_specs=[
                pl.BlockSpec((tm, k), lambda i: (i, 0)),     # row tile of patches
                pl.BlockSpec((k, n_pad), lambda i: (0, 0)),  # full weight, resident
            ],
            out_specs=pl.BlockSpec((tm, n_pad), lambda i: (i, 0)),
        ),
        compiler_params=pltpu.CompilerParams(
            dimension_semantics=("parallel",),
        ),
    )
    return jax.jit(fn)


def pallas_matmul(a, b):
    """a: (M, K), b: (K, N) -> (M, N) float32 via the Pallas MXU kernel."""
    m, k = a.shape
    k2, n = b.shape
    assert k == k2
    n_pad = _round_up(n, 128)                 # lane-dense output (feedback item)
    tm = 256 if m >= 256 else _round_up(m, 8)
    m_pad = _round_up(m, tm)

    a_p = a.astype(jnp.float32)
    if m_pad != m:
        a_p = jnp.pad(a_p, ((0, m_pad - m), (0, 0)))
    b_p = b.astype(jnp.float32)
    if n_pad != n:
        b_p = jnp.pad(b_p, ((0, 0), (0, n_pad - n)))

    out = _get_matmul_fn(m_pad, k, n_pad, tm)(a_p, b_p)
    return out[:m, :n]


# ----------------------------------------------------------------------------
# Pallas kernel 2: fused scale/bias (+residual) + activation epilogue
#   (covers BatchNorm-apply, ReLU, residual add, conv bias, Tanh)
# ----------------------------------------------------------------------------
def _make_affine_kernel(act, has_residual):
    def _activate(y):
        if act == "relu":
            return jnp.maximum(y, 0.0)
        if act == "tanh":
            return jnp.tanh(y)
        return y

    if has_residual:
        def kernel(x_ref, s_ref, b_ref, r_ref, o_ref):
            o_ref[...] = _activate(x_ref[...] * s_ref[...] + b_ref[...]
                                   + r_ref[...])
    else:
        def kernel(x_ref, s_ref, b_ref, o_ref):
            o_ref[...] = _activate(x_ref[...] * s_ref[...] + b_ref[...])
    return kernel


@functools.lru_cache(maxsize=None)
def _get_affine_fn(m, c, act, has_residual):
    kernel = _make_affine_kernel(act, has_residual)
    full = pl.BlockSpec((m, c), lambda i: (0, 0))
    vec = pl.BlockSpec((1, c), lambda i: (0, 0))
    in_specs = [full, vec, vec] + ([full] if has_residual else [])
    fn = pl.pallas_call(
        kernel,
        out_shape=jax.ShapeDtypeStruct((m, c), jnp.float32),
        grid_spec=pltpu.PrefetchScalarGridSpec(
            num_scalar_prefetch=0,
            grid=(1,),
            in_specs=in_specs,
            out_specs=full,
        ),
    )
    return jax.jit(fn)


def affine_act(x, scale, bias, act="none", residual=None):
    """y = act(x * scale + bias [+ residual]); x: (M, C), scale/bias: (C,)."""
    m, c = x.shape
    scale = scale.reshape(1, c).astype(jnp.float32)
    bias = bias.reshape(1, c).astype(jnp.float32)
    fn = _get_affine_fn(m, c, act, residual is not None)
    if residual is None:
        return fn(x.astype(jnp.float32), scale, bias)
    return fn(x.astype(jnp.float32), scale, bias, residual.astype(jnp.float32))


def batch_norm(x_flat, gamma, beta, act="none", residual=None, eps=1e-5):
    """Training-mode BatchNorm2d on channels-last flat activations (N*H*W, C)."""
    # TODO(synk): batch mean/var are tiny per-channel reductions done in jnp;
    # a dedicated Pallas reduction kernel is not worth it at these sizes.
    mean = jnp.mean(x_flat, axis=0)
    var = jnp.mean(jnp.square(x_flat - mean), axis=0)
    inv = 1.0 / jnp.sqrt(var + eps)
    scale = gamma * inv
    bias = beta - mean * scale
    return affine_act(x_flat, scale, bias, act=act, residual=residual)


# ----------------------------------------------------------------------------
# conv plumbing (layout / padding / patch extraction in jnp, matmul in Pallas)
# ----------------------------------------------------------------------------
def reflect_pad(x_nhwc, p):
    return jnp.pad(x_nhwc, ((0, 0), (p, p), (p, p), (0, 0)), mode="reflect")


def zero_pad(x_nhwc, p):
    return jnp.pad(x_nhwc, ((0, 0), (p, p), (p, p), (0, 0)))


def _im2col(x, kh, kw, stride):
    # x: (N, H, W, C) -> (N*Ho*Wo, kh*kw*C), feature order (i, j, c)
    n, h, w, c = x.shape
    ho = (h - kh) // stride + 1
    wo = (w - kw) // stride + 1
    cols = []
    for i in range(kh):
        for j in range(kw):
            cols.append(x[:, i:i + stride * ho:stride,
                          j:j + stride * wo:stride, :])
    patches = jnp.concatenate(cols, axis=-1)
    return patches.reshape(n * ho * wo, kh * kw * c), (n, ho, wo)


def conv2d_flat(x_nhwc, w_oihw, stride=1):
    """Cross-correlation (PyTorch Conv2d); returns ((N*Ho*Wo, O), (N, Ho, Wo))."""
    o, i, kh, kw = w_oihw.shape
    w2 = jnp.transpose(w_oihw, (2, 3, 1, 0)).reshape(kh * kw * i, o)
    patches, shp = _im2col(x_nhwc, kh, kw, stride)
    return pallas_matmul(patches, w2), shp


def conv_transpose2d_flat(x_nhwc, w_eq_oihw):
    """nn.ConvTranspose2d(k=3, stride=2, padding=1, output_padding=1) equivalent:
    stride-dilate the input, pad (1, 2) per spatial side, 3x3 stride-1 conv."""
    n, h, w, c = x_nhwc.shape
    xd = jnp.zeros((n, 2 * h - 1, 2 * w - 1, c), x_nhwc.dtype)
    xd = xd.at[:, ::2, ::2, :].set(x_nhwc)
    xp = jnp.pad(xd, ((0, 0), (1, 2), (1, 2), (0, 0)))
    return conv2d_flat(xp, w_eq_oihw, stride=1)


# ----------------------------------------------------------------------------
# parameters
# ----------------------------------------------------------------------------
def _conv_w(key, o, i, k):
    fan_in = i * k * k
    return jax.random.normal(key, (o, i, k, k), jnp.float32) / np.sqrt(fan_in)


def _bn_params(c):
    return {"gamma": jnp.ones((c,), jnp.float32),
            "beta": jnp.zeros((c,), jnp.float32)}


def init_encoder(key, in_nc, ngf, n_blocks):
    keys = jax.random.split(key, 3 + 2 * n_blocks)
    p = {
        "c0": _conv_w(keys[0], ngf, in_nc, 7), "bn0": _bn_params(ngf),
        "c1": _conv_w(keys[1], ngf * 2, ngf, 3), "bn1": _bn_params(ngf * 2),
        "c2": _conv_w(keys[2], ngf * 4, ngf * 2, 3), "bn2": _bn_params(ngf * 4),
        "blocks": [],
    }
    dim = ngf * 4
    for b in range(n_blocks):
        p["blocks"].append({
            "cw1": _conv_w(keys[3 + 2 * b], dim, dim, 3), "bnA": _bn_params(dim),
            "cw2": _conv_w(keys[4 + 2 * b], dim, dim, 3), "bnB": _bn_params(dim),
        })
    return p


def init_decoder(key, ngf_dec, out_nc):
    keys = jax.random.split(key, 4)
    return {
        "u1": _conv_w(keys[0], ngf_dec * 2, ngf_dec * 4, 3),
        "bn1": _bn_params(ngf_dec * 2),
        "u2": _conv_w(keys[1], ngf_dec, ngf_dec * 2, 3),
        "bn2": _bn_params(ngf_dec),
        "cf": _conv_w(keys[2], out_nc, ngf_dec, 7),
        "cf_b": 0.01 * jax.random.normal(keys[3], (out_nc,), jnp.float32),
    }


# ----------------------------------------------------------------------------
# encoder / decoder forward
# ----------------------------------------------------------------------------
def run_encoder(x_nhwc, p):
    # ReflectionPad(3) -> 7x7 conv -> BN -> ReLU
    y, (n, hh, ww) = conv2d_flat(reflect_pad(x_nhwc, 3), p["c0"], stride=1)
    y = batch_norm(y, p["bn0"]["gamma"], p["bn0"]["beta"], act="relu")
    x = y.reshape(n, hh, ww, -1)
    # two stride-2 downsampling convs (zero padding 1) -> BN -> ReLU
    for cw, bn in ((p["c1"], p["bn1"]), (p["c2"], p["bn2"])):
        y, (n, hh, ww) = conv2d_flat(zero_pad(x, 1), cw, stride=2)
        y = batch_norm(y, bn["gamma"], bn["beta"], act="relu")
        x = y.reshape(n, hh, ww, -1)
    # resnet blocks: [ReflPad1, conv3, BN, ReLU, ReflPad1, conv3, BN] + residual
    for bp in p["blocks"]:
        res = x.reshape(n * hh * ww, -1)
        y, _ = conv2d_flat(reflect_pad(x, 1), bp["cw1"], stride=1)
        y = batch_norm(y, bp["bnA"]["gamma"], bp["bnA"]["beta"], act="relu")
        mid = y.reshape(n, hh, ww, -1)
        y, _ = conv2d_flat(reflect_pad(mid, 1), bp["cw2"], stride=1)
        y = batch_norm(y, bp["bnB"]["gamma"], bp["bnB"]["beta"],
                       act="none", residual=res)
        x = y.reshape(n, hh, ww, -1)
    return x


def run_decoder(x_nhwc, p):
    for wk, bk in (("u1", "bn1"), ("u2", "bn2")):
        y, (n, hh, ww) = conv_transpose2d_flat(x_nhwc, p[wk])
        y = batch_norm(y, p[bk]["gamma"], p[bk]["beta"], act="relu")
        x_nhwc = y.reshape(n, hh, ww, -1)
    y, (n, hh, ww) = conv2d_flat(reflect_pad(x_nhwc, 3), p["cf"], stride=1)
    ones = jnp.ones_like(p["cf_b"])
    y = affine_act(y, ones, p["cf_b"], act="tanh")      # conv bias + Tanh fused
    return y.reshape(n, hh, ww, -1)


# ----------------------------------------------------------------------------
# ResnetSetGenerator forward
# ----------------------------------------------------------------------------
class ResnetSetGeneratorPallas:
    def __init__(self, key, input_nc, output_nc, ngf=64, n_blocks=6):
        self.input_nc = input_nc
        self.output_nc = output_nc
        k1, k2, k3, k4 = jax.random.split(key, 4)
        self.enc_img = init_encoder(k1, input_nc, ngf, n_blocks)
        self.enc_seg = init_encoder(k2, 1, ngf, n_blocks)
        self.dec_img = init_decoder(k3, 2 * ngf, output_nc)
        self.dec_seg = init_decoder(k4, 3 * ngf, 1)

    def __call__(self, inp_nchw):
        img = inp_nchw[:, :self.input_nc]
        segs = inp_nchw[:, self.input_nc:]
        n_seg = segs.shape[1]

        # mean = (segs + 1).mean(0).mean(-1).mean(-1); host-side gating as in PyTorch.
        mean = np.array(jnp.mean(segs + 1.0, axis=(0, 2, 3)))
        if mean.sum() == 0:
            mean[0] = 1.0

        to_nhwc = lambda t: jnp.transpose(t, (0, 2, 3, 1))

        # PyTorch calls encoder_img twice; output is identical (no dropout), call once.
        enc_img = run_encoder(to_nhwc(img), self.enc_img)

        enc_segs = []
        for i in range(n_seg):
            if mean[i] > 0:
                enc_segs.append(run_encoder(to_nhwc(segs[:, i:i + 1]),
                                            self.enc_seg))
        enc_segs_sum = jnp.sum(jnp.stack(enc_segs, axis=0), axis=0)

        feat = jnp.concatenate([enc_img, enc_segs_sum], axis=-1)
        outs = [run_decoder(feat, self.dec_img)]
        idx = 0
        for i in range(n_seg):
            if mean[i] > 0:
                enc_seg = enc_segs[idx]
                idx += 1
                feat = jnp.concatenate([enc_seg, enc_img, enc_segs_sum], axis=-1)
                outs.append(run_decoder(feat, self.dec_seg))
            else:
                outs.append(to_nhwc(segs[:, i:i + 1]))
        out_nhwc = jnp.concatenate(outs, axis=-1)
        return jnp.transpose(out_nhwc, (0, 3, 1, 2))     # back to NCHW


# ----------------------------------------------------------------------------
# main
# ----------------------------------------------------------------------------
if __name__ == "__main__":
    key = jax.random.PRNGKey(0)
    k_param, k_x, k_a, k_b = jax.random.split(key, 4)

    # Sanity check: Pallas MXU matmul (with M/N padding paths) vs NumPy.
    a = jax.random.normal(k_a, (300, 147), jnp.float32)
    b = jax.random.normal(k_b, (147, 24), jnp.float32)
    ref = np.asarray(a) @ np.asarray(b)
    got = np.asarray(pallas_matmul(a, b))
    np.testing.assert_allclose(got, ref, rtol=2e-2, atol=2e-1)

    # Small but structurally faithful generator: 3 image channels + 2 seg masks.
    input_nc, output_nc, n_seg = 3, 3, 2
    model = ResnetSetGeneratorPallas(k_param, input_nc=input_nc,
                                     output_nc=output_nc, ngf=8, n_blocks=2)

    x = jax.random.normal(k_x, (2, input_nc + n_seg, 16, 16), jnp.float32)
    out = model(x)
    out = jax.block_until_ready(out)

    assert out.shape == (2, output_nc + n_seg, 16, 16), out.shape
    assert bool(jnp.all(jnp.isfinite(out)))
    # decoder outputs went through tanh -> bounded
    assert float(jnp.max(jnp.abs(out[:, :output_nc]))) <= 1.0 + 1e-5

    print("KERNEL_OK")
</pallas_src>

<mosaic_0001>
module attributes {stable_mosaic.version = 11 : i64} {
  func.func @_matmul_kernel(%arg0: i32, %arg1: memref<256x147xf32, #tpu.memory_space<vmem>>, %arg2: memref<147x128xf32, #tpu.memory_space<vmem>>, %arg3: memref<256x128xf32, #tpu.memory_space<vmem>>) attributes {dimension_semantics = [#tpu.dimension_semantics<parallel>], iteration_bounds = array<i64: 2>, scalar_prefetch = 0 : i64, scratch_operands = 0 : i64, tpu.core_type = #tpu.core_type<tc>, window_params = [{transform_indices = @transform_0, window_bounds = array<i64: 256, 147>}, {pipeline_mode = #tpu.pipeline_mode<synchronous>, transform_indices = @transform_1, window_bounds = array<i64: 147, 128>}, {transform_indices = @transform_2, window_bounds = array<i64: 256, 128>}]} {
    %c0 = arith.constant 0 : index
    %c0_0 = arith.constant 0 : index
    %0 = vector.load %arg1[%c0, %c0_0] : memref<256x147xf32, #tpu.memory_space<vmem>>, vector<256x147xf32>
    %c0_1 = arith.constant 0 : index
    %c0_2 = arith.constant 0 : index
    %1 = vector.load %arg2[%c0_1, %c0_2] : memref<147x128xf32, #tpu.memory_space<vmem>>, vector<147x128xf32>
    %cst = arith.constant dense<0.000000e+00> : vector<256x128xf32>
    %2 = tpu.matmul %0, %1, %cst {dimension_numbers = #tpu.dot_dimension_numbers<[1], [0], [0], [1], [0, 0, 1, 1], [], []>} : vector<256x147xf32>, vector<147x128xf32>, vector<256x128xf32> -> vector<256x128xf32>
    %c0_3 = arith.constant 0 : index
    %c0_4 = arith.constant 0 : index
    %3 = vector.load %arg3[%c0_3, %c0_4] : memref<256x128xf32, #tpu.memory_space<vmem>>, vector<256x128xf32>
    tpu.vector_store %arg3[%c0_3, %c0_4], %2 {strides = array<i32>} : memref<256x128xf32, #tpu.memory_space<vmem>>, vector<256x128xf32>,
    return
  }
  func.func @transform_0(%arg0: i32) -> (i32, i32) {
    %c0_i32 = arith.constant 0 : i32
    %c0_i32_0 = arith.constant 0 : i32
    return %arg0, %c0_i32 : i32, i32
  }
  func.func @transform_1(%arg0: i32) -> (i32, i32) {
    %c0_i32 = arith.constant 0 : i32
    %c0_i32_0 = arith.constant 0 : i32
    %c0_i32_1 = arith.constant 0 : i32
    return %c0_i32, %c0_i32_0 : i32, i32
  }
  func.func @transform_2(%arg0: i32) -> (i32, i32) {
    %c0_i32 = arith.constant 0 : i32
    %c0_i32_0 = arith.constant 0 : i32
    return %arg0, %c0_i32 : i32, i32
  }
}

</mosaic_0001>

<llo_original>
// kernel: tpu_custom_call.1
$region0: #{tpu_custom_call.1}
  #allocation0 [shape = 'u32[]', space=smem, size = 0x4, offset = 0x4, fixed_abs, tag = 'smem constant byte address 0x4 - core index']
  #allocation1 [shape = 'u32[144,128]{1,0:T(1,128)}', space=vmem, size = 0x12000, scoped, tag = 'internal scratch']
  %s0 = inlined_call_operand.vmem [shape: f32[512,147], index: 0, kind: input, shape index: {}]
  %s1 = inlined_call_operand.vmem [shape: f32[147,128], index: 1, kind: input, shape index: {}]
  %s2 = inlined_call_operand.hbm [shape: f32[512,128], index: 2, kind: output, shape index: {}]
  %s3 = sld [smem:[#allocation0]]
  $region41: #{tpu_custom_call.1} parent=0
    _
  %s5 = ssub.s32 1, %s3
  %s6 = scalar_select 0, %s5, %s3
  $region1: #{tpu_custom_call.1} parent=0
    #allocation2 [shape = 'u8[262144]{0}', space=vmem, size = 0x40000, scoped, tag = 'output window, operand 0']
    #allocation3 [shape = 's32[2]{0}', space=sflag, size = 0x8, scoped, tag = 'scoped memory for tpu_custom_call.1']
    %7 = vsyncpa [#allocation3], 0
    %s8 = scalar_lea.sflag [#allocation3], 1
    %9 = vsyncpa %s8, 0
    loop: start=0, step=1, limit=4
    $region2: #{tpu_custom_call.1} parent=1 // loop_pre_header
      _
    $region3: #{tpu_custom_call.1} parent=1 // loop_header
      %s11 = sphi 0, %s15
      %p12 = scmp.ge.s32.totalorder %s11, 4
      %s21 = sphi 0, %s23
      %s24 = sphi 0, %s21
      %s25 = sphi 0, %s24
      %s41 = sphi 0, %s25
      %s45 = sphi 0, %s45
      %s47 = sphi 0, %s45
      %s48 = sphi 0, %s47
      %s62 = sphi 0, %s48
      %s68 = sphi 0, %s70
      %s71 = sphi 0, %s68
      %s72 = sphi 0, %s71
      %s88 = sphi 0, %s72
    $region4: #{tpu_custom_call.1} parent=1 // loop_header_branch
      %14 = sbr.rel (%p12) target = $region8
    $region5: #{tpu_custom_call.1} parent=1 // loop_body
      %s16 = ssub.s32 %s11, 1
      %s17 = ssub.s32 %s11, 2
      %s18 = sadd.s32 %s11, 1
      %s19 = ssub.s32 %s11, %s18
      %p20 = scmp.eq.s32.totalorder %s19, 0
      %s22 = sadd.s32 %s21, 1
      %s23 = scalar_select %p20, %s21, %s22
      %p26 = pneg %p20
      %p27 = scmp.eq.s32.totalorder %s11, 1
      %p28 = por %p26, %p27
      %p29 = scmp.ne.s32.totalorder %s21, %s24
      %p30 = scmp.eq.s32.totalorder %s11, 0
      %p31 = por %p29, %p30
      %p32 = scmp.ne.s32.totalorder %s21, %s24
      %p33 = scmp.eq.s32.totalorder %s16, 1
      %p34 = por %p32, %p33
      %p35 = scmp.ne.s32.totalorder %s24, %s25
      %p36 = scmp.eq.s32.totalorder %s16, 0
      %p37 = por %p35, %p36
      %p38 = scmp.ne.s32.totalorder %s24, %s25
      %p39 = scmp.eq.s32.totalorder %s17, 1
      %p40 = por %p38, %p39
      %p42 = scmp.ne.s32.totalorder %s25, %s41
      %p43 = scmp.eq.s32.totalorder %s17, 0
      %p44 = por %p42, %p43
      %s46 = sadd.s32 %s45, 1
      %p49 = scmp.eq.s32.totalorder %s11, 1
      %p50 = scmp.ne.s32.totalorder %s45, %s47
      %p51 = scmp.eq.s32.totalorder %s11, 0
      %p52 = por %p50, %p51
      %p53 = scmp.ne.s32.totalorder %s45, %s47
      %p54 = scmp.eq.s32.totalorder %s16, 1
      %p55 = por %p53, %p54
      %p56 = scmp.ne.s32.totalorder %s47, %s48
      %p57 = scmp.eq.s32.totalorder %s16, 0
      %p58 = por %p56, %p57
      %p59 = scmp.ne.s32.totalorder %s47, %s48
      %p60 = scmp.eq.s32.totalorder %s17, 1
      %p61 = por %p59, %p60
      %p63 = scmp.ne.s32.totalorder %s48, %s62
      %p64 = scmp.eq.s32.totalorder %s17, 0
      %p65 = por %p63, %p64
      %s66 = ssub.s32 %s11, %s18
      %p67 = scmp.eq.s32.totalorder %s66, 0
      %s69 = sadd.s32 %s68, 1
      %s70 = scalar_select %p67, %s68, %s69
      %p73 = pneg %p67
      %p74 = scmp.eq.s32.totalorder %s11, 1
      %p75 = por %p73, %p74
      %p76 = scmp.ne.s32.totalorder %s68, %s71
      %p77 = scmp.eq.s32.totalorder %s11, 0
      %p78 = por %p76, %p77
      %p79 = scmp.ne.s32.totalorder %s68, %s71
      %p80 = scmp.eq.s32.totalorder %s16, 1
      %p81 = por %p79, %p80
      %p82 = scmp.ne.s32.totalorder %s71, %s72
      %p83 = scmp.eq.s32.totalorder %s16, 0
      %p84 = por %p82, %p83
      %p85 = scmp.ne.s32.totalorder %s71, %s72
      %p86 = scmp.eq.s32.totalorder %s17, 1
      %p87 = por %p85, %p86
      %p89 = scmp.ne.s32.totalorder %s72, %s88
      %p90 = scmp.eq.s32.totalorder %s17, 0
      %p91 = por %p89, %p90
      %p92 = scmp.le.s32.totalorder 1, %s11
      %p93 = scmp.lt.s32.totalorder %s11, 3
      %p94 = pnand %p92, %p93
      %p95 = pneg %p94
      // Predicated region
      $region9: #{tpu_custom_call.1} parent=5 // pred_check
        _
      $region10: #{tpu_custom_call.1} parent=5 // pred_check_branch
        %97 = sbr.rel (%p94) target = $region12
      $region11: #{tpu_custom_call.1} parent=5 // pred_region
        %s98 = ssub.s32 %s11, 1
        // Predicated region
        $region13: #{tpu_custom_call.1} parent=11 // pred_check
          %p99 = pneg %p58
        $region14: #{tpu_custom_call.1} parent=11 // pred_check_branch
          %101 = sbr.rel (%p99) target = $region16
        $region15: #{tpu_custom_call.1} parent=11 // pred_region
          _
        $region16: #{tpu_custom_call.1} parent=11 // pred_fallthru
          _
      $region12: #{tpu_custom_call.1} parent=5 // pred_fallthru
        _
      %p102 = scmp.lt.s32.totalorder %s11, 2
      // Predicated region
      $region17: #{tpu_custom_call.1} parent=5 // pred_check
        %p103 = pneg %p102
      $region18: #{tpu_custom_call.1} parent=5 // pred_check_branch
        %105 = sbr.rel (%p103) target = $region20
      $region19: #{tpu_custom_call.1} parent=5 // pred_region
        // Predicated region
        $region21: #{tpu_custom_call.1} parent=19 // pred_check
          %p106 = pneg %p31
        $region22: #{tpu_custom_call.1} parent=19 // pred_check_branch
          %108 = sbr.rel (%p106) target = $region24
        $region23: #{tpu_custom_call.1} parent=19 // pred_region
          %s109 = smul.u32 32, %s11
          %p110 = scmp.lt.s32.totalorder %s109, 63
          %s111 = scalar_select %p110, %s109, 63
          %s112 = smul.addr %s111, 2
          %s113 = smul.addr %s112, 8
          %s114 = scalar_lea.vmem %s0, %s113
          %s115 = smul.u32 32, %s11
        $region24: #{tpu_custom_call.1} parent=19 // pred_fallthru
          _
      $region20: #{tpu_custom_call.1} parent=5 // pred_fallthru
        _
      %p116 = scmp.le.s32.totalorder 1, %s11
      %p117 = scmp.lt.s32.totalorder %s11, 3
      %p118 = pnand %p116, %p117
      %p119 = pneg %p118
      // Predicated region
      $region25: #{tpu_custom_call.1} parent=5 // pred_check
        _
      $region26: #{tpu_custom_call.1} parent=5 // pred_check_branch
        %121 = sbr.rel (%p118) target = $region28
      $region27: #{tpu_custom_call.1} parent=5 // pred_region
        %s122 = ssub.s32 %s11, 1
        %s123 = smul.u32 32, %s16
        %p124 = scmp.lt.s32.totalorder %s123, 63
        %s125 = scalar_select %p124, %s123, 63
        %s126 = smul.addr %s125, 2
        %s127 = smul.addr %s126, 8
        %s128 = scalar_lea.vmem %s0, %s127
        %p129 = pneg %p37
        %p130 = pneg %p34
        %p131 = pneg %p58
        %p132 = pneg %p55
        %p133 = pneg %p84
        %p134 = pneg %p81
        %s135 = sand.u32 %s71, 1
        %s136 = scalar_lea.sflag [#allocation3], %s135
        %s137 = sand.u32 %s71, 1
        %s138 = smul.addr %s137, 256
        %s139 = scalar_lea.vmem [#allocation2], %s138
        %s140 = smul.u32 32, %s16
        %p141 = scmp.lt.s32.totalorder %s140, 63
        %s142 = scalar_select %p141, %s140, 63
        %s143 = smul.addr %s142, 2
        %s144 = smul.addr %s143, 8
        %s145 = scalar_lea.vmem %s0, %s144
        %s146 = smul.u32 32, %s16
        %s147 = smul.u32 32, %s16
        %v148 = vld [vmem:[%s145] sm:$0xff]
        %v149 = vld [vmem:[%s145 + $0x8] sm:$0xff]
        %v150 = vld [vmem:[%s145 + $0x10] sm:$0xff]
        %v151 = vld [vmem:[%s145 + $0x18] sm:$0xff]
        %v152 = vld [vmem:[%s145 + $0x20] sm:$0xff]
        %v153 = vld [vmem:[%s145 + $0x28] sm:$0xff]
        %v154 = vld [vmem:[%s145 + $0x30] sm:$0xff]
        %v155 = vld [vmem:[%s145 + $0x38] sm:$0xff]
        %v156 = vld [vmem:[%s145 + $0x40] sm:$0xff]
        %v157 = vld [vmem:[%s145 + $0x48] sm:$0xff]
        %v158 = vld [vmem:[%s145 + $0x50] sm:$0xff]
        %v159 = vld [vmem:[%s145 + $0x58] sm:$0xff]
        %v160 = vld [vmem:[%s145 + $0x60] sm:$0xff]
        %v161 = vld [vmem:[%s145 + $0x68] sm:$0xff]
        %v162 = vld [vmem:[%s145 + $0x70] sm:$0xff]
        %v163 = vld [vmem:[%s145 + $0x78] sm:$0xff]
        %v164 = vld [vmem:[%s145 + $0x80] sm:$0xff]
        %v165 = vld [vmem:[%s145 + $0x88] sm:$0xff]
        %v166 = vld [vmem:[%s145 + $0x90] sm:$0xff]
        %v167 = vld [vmem:[%s145 + $0x98] sm:$0xff]
        %v168 = vld [vmem:[%s145 + $0xa0] sm:$0xff]
        %v169 = vld [vmem:[%s145 + $0xa8] sm:$0xff]
        %v170 = vld [vmem:[%s145 + $0xb0] sm:$0xff]
        %v171 = vld [vmem:[%s145 + $0xb8] sm:$0xff]
        %v172 = vld [vmem:[%s145 + $0xc0] sm:$0xff]
        %v173 = vld [vmem:[%s145 + $0xc8] sm:$0xff]
        %v174 = vld [vmem:[%s145 + $0xd0] sm:$0xff]
        %v175 = vld [vmem:[%s145 + $0xd8] sm:$0xff]
        %v176 = vld [vmem:[%s145 + $0xe0] sm:$0xff]
        %v177 = vld [vmem:[%s145 + $0xe8] sm:$0xff]
        %v178 = vld [vmem:[%s145 + $0xf0] sm:$0xff]
        %v179 = vld [vmem:[%s145 + $0xf8] sm:$0xff]
        %v180 = vld [vmem:[%s145 + $0x100] sm:$0xff]
        %v181 = vld [vmem:[%s145 + $0x108] sm:$0xff]
        %v182 = vld [vmem:[%s145 + $0x110] sm:$0xff]
        %v183 = vld [vmem:[%s145 + $0x118] sm:$0xff]
        %v184 = vld [vmem:[%s145 + $0x120] sm:$0xff]
        %v185 = vld [vmem:[%s145 + $0x128] sm:$0xff]
        %v186 = vld [vmem:[%s145 + $0x130] sm:$0xff]
        %v187 = vld [vmem:[%s145 + $0x138] sm:$0xff]
        %v188 = vld [vmem:[%s145 + $0x140] sm:$0xff]
        %v189 = vld [vmem:[%s145 + $0x148] sm:$0xff]
        %v190 = vld [vmem:[%s145 + $0x150] sm:$0xff]
        %v191 = vld [vmem:[%s145 + $0x158] sm:$0xff]
        %v192 = vld [vmem:[%s145 + $0x160] sm:$0xff]
        %v193 = vld [vmem:[%s145 + $0x168] sm:$0xff]
        %v194 = vld [vmem:[%s145 + $0x170] sm:$0xff]
        %v195 = vld [vmem:[%s145 + $0x178] sm:$0xff]
        %v196 = vld [vmem:[%s145 + $0x180] sm:$0xff]
        %v197 = vld [vmem:[%s145 + $0x188] sm:$0xff]
        %v198 = vld [vmem:[%s145 + $0x190] sm:$0xff]
        %v199 = vld [vmem:[%s145 + $0x198] sm:$0xff]
        %v200 = vld [vmem:[%s145 + $0x1a0] sm:$0xff]
        %v201 = vld [vmem:[%s145 + $0x1a8] sm:$0xff]
        %v202 = vld [vmem:[%s145 + $0x1b0] sm:$0xff]
        %v203 = vld [vmem:[%s145 + $0x1b8] sm:$0xff]
        %v204 = vld [vmem:[%s145 + $0x1c0] sm:$0xff]
        %v205 = vld [vmem:[%s145 + $0x1c8] sm:$0xff]
        %v206 = vld [vmem:[%s145 + $0x1d0] sm:$0xff]
        %v207 = vld [vmem:[%s145 + $0x1d8] sm:$0xff]
        %v208 = vld [vmem:[%s145 + $0x1e0] sm:$0xff]
        %v209 = vld [vmem:[%s145 + $0x1e8] sm:$0xff]
        %v210 = vld [vmem:[%s145 + $0x1f0] sm:$0xff]
        %v211 = vld [vmem:[%s145 + $0x1f8] sm:$0xff]
        %v212 = vld [vmem:[%s1] sm:$0xff]
        %v213 = vld [vmem:[%s1 + $0x8] sm:$0xff]
        %v214 = vld [vmem:[%s1 + $0x10] sm:$0xff]
        %v215 = vld [vmem:[%s1 + $0x18] sm:$0xff]
        %v216 = vld [vmem:[%s1 + $0x20] sm:$0xff]
        %v217 = vld [vmem:[%s1 + $0x28] sm:$0xff]
        %v218 = vld [vmem:[%s1 + $0x30] sm:$0xff]
        %v219 = vld [vmem:[%s1 + $0x38] sm:$0xff]
        %v220 = vld [vmem:[%s1 + $0x40] sm:$0xff]
        %v221 = vld [vmem:[%s1 + $0x48] sm:$0xff]
        %v222 = vld [vmem:[%s1 + $0x50] sm:$0xff]
        %v223 = vld [vmem:[%s1 + $0x58] sm:$0xff]
        %v224 = vld [vmem:[%s1 + $0x60] sm:$0xff]
        %v225 = vld [vmem:[%s1 + $0x68] sm:$0xff]
        %v226 = vld [vmem:[%s1 + $0x70] sm:$0xff]
        %v227 = vld [vmem:[%s1 + $0x78] sm:$0xff]
        %v228 = vld [vmem:[%s1 + $0x80] sm:$0xff]
        %v229 = vld [vmem:[%s1 + $0x88] sm:$0xff]
        %v230 = vld [vmem:[%s1 + $0x90] sm:$0x7]
        %vm231 = vcmask 154624
        %v233 = vsel %vm231, %v149, 0
        %v236 = vsel %vm231, %v151, 0
        %v239 = vsel %vm231, %v153, 0
        %v242 = vsel %vm231, %v155, 0
        %v245 = vsel %vm231, %v157, 0
        %v248 = vsel %vm231, %v159, 0
        %v251 = vsel %vm231, %v161, 0
        %v254 = vsel %vm231, %v163, 0
        %v257 = vsel %vm231, %v165, 0
        %v260 = vsel %vm231, %v167, 0
        %v263 = vsel %vm231, %v169, 0
        %v266 = vsel %vm231, %v171, 0
        %v269 = vsel %vm231, %v173, 0
        %v272 = vsel %vm231, %v175, 0
        %v275 = vsel %vm231, %v177, 0
        %v278 = vsel %vm231, %v179, 0
        %v281 = vsel %vm231, %v181, 0
        %v284 = vsel %vm231, %v183, 0
        %v287 = vsel %vm231, %v185, 0
        %v290 = vsel %vm231, %v187, 0
        %v293 = vsel %vm231, %v189, 0
        %v296 = vsel %vm231, %v191, 0
        %v299 = vsel %vm231, %v193, 0
        %v302 = vsel %vm231, %v195, 0
        %v305 = vsel %vm231, %v197, 0
        %v308 = vsel %vm231, %v199, 0
        %v311 = vsel %vm231, %v201, 0
        %v314 = vsel %vm231, %v203, 0
        %v317 = vsel %vm231, %v205, 0
        %v320 = vsel %vm231, %v207, 0
        %v323 = vsel %vm231, %v209, 0
        %v326 = vsel %vm231, %v211, 0
        %vm328 = vcmask 1042432
        %v330 = vsel %vm328, %v230, 0
        %332 = vmatprep.subr.mxu0 0.0
        %333 = vmatpush1.msra.mxu0 %v227
        %334 = vmatprep.subr.mxu0 0.0
        %335 = vmatpush1.msra.mxu0 %v226
        %336 = vmatprep.subr.mxu0 0.0
        %337 = vmatpush1.msra.mxu0 %v225
        %338 = vmatprep.subr.mxu0 0.0
        %339 = vmatpush1.msra.mxu0 %v224
        %340 = vmatprep.subr.mxu0 0.0
        %341 = vmatpush1.msra.mxu0 %v223
        %342 = vmatprep.subr.mxu0 0.0
        %343 = vmatpush1.msra.mxu0 %v222
        %344 = vmatprep.subr.mxu0 0.0
        %345 = vmatpush1.msra.mxu0 %v221
        %346 = vmatprep.subr.mxu0 0.0
        %347 = vmatpush1.msra.mxu0 %v220
        %348 = vmatprep.subr.mxu0 0.0
        %349 = vmatpush1.msra.mxu0 %v219
        %350 = vmatprep.subr.mxu0 0.0
        %351 = vmatpush1.msra.mxu0 %v218
        %352 = vmatprep.subr.mxu0 0.0
        %353 = vmatpush1.msra.mxu0 %v217
        %354 = vmatprep.subr.mxu0 0.0
        %355 = vmatpush1.msra.mxu0 %v216
        %356 = vmatprep.subr.mxu0 0.0
        %357 = vmatpush1.msra.mxu0 %v215
        %358 = vmatprep.subr.mxu0 0.0
        %359 = vmatpush1.msra.mxu0 %v214
        %360 = vmatprep.subr.mxu0 0.0
        %361 = vmatpush1.msra.mxu0 %v213
        %362 = vmatprep.subr.mxu0 0.0
        %363 = vmatpush1.msra.mxu0 %v212
        %364 = vmatprep.subr.mxu0 0.0
        %365 = vmatpush2.msra.mxu0 0.0
        %366 = vmatprep.subr.mxu0 0.0
        %367 = vmatpush2.msra.mxu0 0.0
        %368 = vmatprep.subr.mxu0 0.0
        %369 = vmatpush2.msra.mxu0 0.0
        %370 = vmatprep.subr.mxu0 0.0
        %371 = vmatpush2.msra.mxu0 0.0
        %372 = vmatprep.subr.mxu0 0.0
        %373 = vmatpush2.msra.mxu0 0.0
        %374 = vmatprep.subr.mxu0 0.0
        %375 = vmatpush2.msra.mxu0 0.0
        %376 = vmatprep.subr.mxu0 0.0
        %377 = vmatpush2.msra.mxu0 0.0
        %378 = vmatprep.subr.mxu0 0.0
        %379 = vmatpush2.msra.mxu0 0.0
        %380 = vmatprep.subr.mxu0 0.0
        %381 = vmatpush2.msra.mxu0 0.0
        %382 = vmatprep.subr.mxu0 0.0
        %383 = vmatpush2.msra.mxu0 0.0
        %384 = vmatprep.subr.mxu0 0.0
        %385 = vmatpush2.msra.mxu0 0.0
        %386 = vmatprep.subr.mxu0 0.0
        %387 = vmatpush2.msra.mxu0 0.0
        %388 = vmatprep.subr.mxu0 0.0
        %389 = vmatpush2.msra.mxu0 0.0
        %390 = vmatprep.subr.mxu0 0.0
        %391 = vmatpush2.msra.mxu0 %v330
        %392 = vmatprep.subr.mxu0 0.0
        %393 = vmatpush2.msra.mxu0 %v229
        %394 = vmatprep.subr.mxu0 0.0
        %395 = vmatpush2.msra.mxu0 %v228
        %396 = vmatprep.mubr.f32.mxu0 %v233
        %397 = vmatmul.mubr.f32.gmra.mxu0 %v148
        %v398 = vpop.f32.mrf.mxu0
        %v399 = vadd.f32 0.0, %v398
        %v400 = vpop.f32.mrf.mxu0
        %401 = vmatprep.mubr.f32.mxu0 %v236
        %402 = vmatmul.mubr.f32.gmra.mxu0 %v150
        %v403 = vpop.f32.mrf.mxu0
        %v404 = vadd.f32 0.0, %v403
        %v405 = vpop.f32.mrf.mxu0
        %406 = vmatprep.mubr.f32.mxu0 %v239
        %407 = vmatmul.mubr.f32.gmra.mxu0 %v152
        %v408 = vpop.f32.mrf.mxu0
        %v409 = vadd.f32 0.0, %v408
        %v410 = vpop.f32.mrf.mxu0
        %411 = vmatprep.mubr.f32.mxu0 %v242
        %412 = vmatmul.mubr.f32.gmra.mxu0 %v154
        %v413 = vpop.f32.mrf.mxu0
        %v414 = vadd.f32 0.0, %v413
        %v415 = vpop.f32.mrf.mxu0
        %416 = vmatprep.mubr.f32.mxu0 %v245
        %417 = vmatmul.mubr.f32.gmra.mxu0 %v156
        %v418 = vpop.f32.mrf.mxu0
        %v419 = vadd.f32 0.0, %v418
        %v420 = vpop.f32.mrf.mxu0
        %421 = vmatprep.mubr.f32.mxu0 %v248
        %422 = vmatmul.mubr.f32.gmra.mxu0 %v158
        %v423 = vpop.f32.mrf.mxu0
        %v424 = vadd.f32 0.0, %v423
        %v425 = vpop.f32.mrf.mxu0
        %426 = vmatprep.mubr.f32.mxu0 %v251
        %427 = vmatmul.mubr.f32.gmra.mxu0 %v160
        %v428 = vpop.f32.mrf.mxu0
        %v429 = vadd.f32 0.0, %v428
        %v430 = vpop.f32.mrf.mxu0
        %431 = vmatprep.mubr.f32.mxu0 %v254
        %432 = vmatmul.mubr.f32.gmra.mxu0 %v162
        %v433 = vpop.f32.mrf.mxu0
        %v434 = vadd.f32 0.0, %v433
        %v435 = vpop.f32.mrf.mxu0
        %436 = vmatprep.mubr.f32.mxu0 %v257
        %437 = vmatmul.mubr.f32.gmra.mxu0 %v164
        %v438 = vpop.f32.mrf.mxu0
        %v439 = vadd.f32 0.0, %v438
        %v440 = vpop.f32.mrf.mxu0
        %441 = vmatprep.mubr.f32.mxu0 %v260
        %442 = vmatmul.mubr.f32.gmra.mxu0 %v166
        %v443 = vpop.f32.mrf.mxu0
        %v444 = vadd.f32 0.0, %v443
        %v445 = vpop.f32.mrf.mxu0
        %446 = vmatprep.mubr.f32.mxu0 %v263
        %447 = vmatmul.mubr.f32.gmra.mxu0 %v168
        %v448 = vpop.f32.mrf.mxu0
        %v449 = vadd.f32 0.0, %v448
        %v450 = vpop.f32.mrf.mxu0
        %451 = vmatprep.mubr.f32.mxu0 %v266
        %452 = vmatmul.mubr.f32.gmra.mxu0 %v170
        %v453 = vpop.f32.mrf.mxu0
        %v454 = vadd.f32 0.0, %v453
        %v455 = vpop.f32.mrf.mxu0
        %456 = vmatprep.mubr.f32.mxu0 %v269
        %457 = vmatmul.mubr.f32.gmra.mxu0 %v172
        %v458 = vpop.f32.mrf.mxu0
        %v459 = vadd.f32 0.0, %v458
        %v460 = vpop.f32.mrf.mxu0
        %461 = vmatprep.mubr.f32.mxu0 %v272
        %462 = vmatmul.mubr.f32.gmra.mxu0 %v174
        %v463 = vpop.f32.mrf.mxu0
        %v464 = vadd.f32 0.0, %v463
        %v465 = vpop.f32.mrf.mxu0
        %466 = vmatprep.mubr.f32.mxu0 %v275
        %467 = vmatmul.mubr.f32.gmra.mxu0 %v176
        %v468 = vpop.f32.mrf.mxu0
        %v469 = vadd.f32 0.0, %v468
        %v470 = vpop.f32.mrf.mxu0
        %471 = vmatprep.mubr.f32.mxu0 %v278
        %472 = vmatmul.mubr.f32.gmra.mxu0 %v178
        %v473 = vpop.f32.mrf.mxu0
        %v474 = vadd.f32 0.0, %v473
        %v475 = vpop.f32.mrf.mxu0
        %476 = vmatprep.mubr.f32.mxu0 %v281
        %477 = vmatmul.mubr.f32.gmra.mxu0 %v180
        %v478 = vpop.f32.mrf.mxu0
        %v479 = vadd.f32 0.0, %v478
        %v480 = vpop.f32.mrf.mxu0
        %481 = vmatprep.mubr.f32.mxu0 %v284
        %482 = vmatmul.mubr.f32.gmra.mxu0 %v182
        %v483 = vpop.f32.mrf.mxu0
        %v484 = vadd.f32 0.0, %v483
        %v485 = vpop.f32.mrf.mxu0
        %486 = vmatprep.mubr.f32.mxu0 %v287
        %487 = vmatmul.mubr.f32.gmra.mxu0 %v184
        %v488 = vpop.f32.mrf.mxu0
        %v489 = vadd.f32 0.0, %v488
        %v490 = vpop.f32.mrf.mxu0
        %491 = vmatprep.mubr.f32.mxu0 %v290
        %492 = vmatmul.mubr.f32.gmra.mxu0 %v186
        %v493 = vpop.f32.mrf.mxu0
        %v494 = vadd.f32 0.0, %v493
        %v495 = vpop.f32.mrf.mxu0
        %496 = vmatprep.mubr.f32.mxu0 %v293
        %497 = vmatmul.mubr.f32.gmra.mxu0 %v188
        %v498 = vpop.f32.mrf.mxu0
        %v499 = vadd.f32 0.0, %v498
        %v500 = vpop.f32.mrf.mxu0
        %501 = vmatprep.mubr.f32.mxu0 %v296
        %502 = vmatmul.mubr.f32.gmra.mxu0 %v190
        %v503 = vpop.f32.mrf.mxu0
        %v504 = vadd.f32 0.0, %v503
        %v505 = vpop.f32.mrf.mxu0
        %506 = vmatprep.mubr.f32.mxu0 %v299
        %507 = vmatmul.mubr.f32.gmra.mxu0 %v192
        %v508 = vpop.f32.mrf.mxu0
        %v509 = vadd.f32 0.0, %v508
        %v510 = vpop.f32.mrf.mxu0
        %511 = vmatprep.mubr.f32.mxu0 %v302
        %512 = vmatmul.mubr.f32.gmra.mxu0 %v194
        %v513 = vpop.f32.mrf.mxu0
        %v514 = vadd.f32 0.0, %v513
        %v515 = vpop.f32.mrf.mxu0
        %516 = vmatprep.mubr.f32.mxu0 %v305
        %517 = vmatmul.mubr.f32.gmra.mxu0 %v196
        %v518 = vpop.f32.mrf.mxu0
        %v519 = vadd.f32 0.0, %v518
        %v520 = vpop.f32.mrf.mxu0
        %521 = vmatprep.mubr.f32.mxu0 %v308
        %522 = vmatmul.mubr.f32.gmra.mxu0 %v198
        %v523 = vpop.f32.mrf.mxu0
        %v524 = vadd.f32 0.0, %v523
        %v525 = vpop.f32.mrf.mxu0
        %526 = vmatprep.mubr.f32.mxu0 %v311
        %527 = vmatmul.mubr.f32.gmra.mxu0 %v200
        %v528 = vpop.f32.mrf.mxu0
        %v529 = vadd.f32 0.0, %v528
        %v530 = vpop.f32.mrf.mxu0
        %531 = vmatprep.mubr.f32.mxu0 %v314
        %532 = vmatmul.mubr.f32.gmra.mxu0 %v202
        %v533 = vpop.f32.mrf.mxu0
        %v534 = vadd.f32 0.0, %v533
        %v535 = vpop.f32.mrf.mxu0
        %536 = vmatprep.mubr.f32.mxu0 %v317
        %537 = vmatmul.mubr.f32.gmra.mxu0 %v204
        %v538 = vpop.f32.mrf.mxu0
        %v539 = vadd.f32 0.0, %v538
        %v540 = vpop.f32.mrf.mxu0
        %541 = vmatprep.mubr.f32.mxu0 %v320
        %542 = vmatmul.mubr.f32.gmra.mxu0 %v206
        %v543 = vpop.f32.mrf.mxu0
        %v544 = vadd.f32 0.0, %v543
        %v545 = vpop.f32.mrf.mxu0
        %546 = vmatprep.mubr.f32.mxu0 %v323
        %547 = vmatmul.mubr.f32.gmra.mxu0 %v208
        %v548 = vpop.f32.mrf.mxu0
        %v549 = vadd.f32 0.0, %v548
        %v550 = vpop.f32.mrf.mxu0
        %551 = vmatprep.mubr.f32.mxu0 %v326
        %552 = vmatmul.mubr.f32.gmra.mxu0 %v210
        %v553 = vpop.f32.mrf.mxu0
        %v554 = vadd.f32 0.0, %v553
        %v555 = vpop.f32.mrf.mxu0
        %556 = vdwg.mxu0
        %557 = vst [vmem:[%s139] sm:$0xff] %v399
        %558 = vst [vmem:[%s139 + $0x8] sm:$0xff] %v404
        %559 = vst [vmem:[%s139 + $0x10] sm:$0xff] %v409
        %560 = vst [vmem:[%s139 + $0x18] sm:$0xff] %v414
        %561 = vst [vmem:[%s139 + $0x20] sm:$0xff] %v419
        %562 = vst [vmem:[%s139 + $0x28] sm:$0xff] %v424
        %563 = vst [vmem:[%s139 + $0x30] sm:$0xff] %v429
        %564 = vst [vmem:[%s139 + $0x38] sm:$0xff] %v434
        %565 = vst [vmem:[%s139 + $0x40] sm:$0xff] %v439
        %566 = vst [vmem:[%s139 + $0x48] sm:$0xff] %v444
        %567 = vst [vmem:[%s139 + $0x50] sm:$0xff] %v449
        %568 = vst [vmem:[%s139 + $0x58] sm:$0xff] %v454
        %569 = vst [vmem:[%s139 + $0x60] sm:$0xff] %v459
        %570 = vst [vmem:[%s139 + $0x68] sm:$0xff] %v464
        %571 = vst [vmem:[%s139 + $0x70] sm:$0xff] %v469
        %572 = vst [vmem:[%s139 + $0x78] sm:$0xff] %v474
        %573 = vst [vmem:[%s139 + $0x80] sm:$0xff] %v479
        %574 = vst [vmem:[%s139 + $0x88] sm:$0xff] %v484
        %575 = vst [vmem:[%s139 + $0x90] sm:$0xff] %v489
        %576 = vst [vmem:[%s139 + $0x98] sm:$0xff] %v494
        %577 = vst [vmem:[%s139 + $0xa0] sm:$0xff] %v499
        %578 = vst [vmem:[%s139 + $0xa8] sm:$0xff] %v504
        %579 = vst [vmem:[%s139 + $0xb0] sm:$0xff] %v509
        %580 = vst [vmem:[%s139 + $0xb8] sm:$0xff] %v514
        %581 = vst [vmem:[%s139 + $0xc0] sm:$0xff] %v519
        %582 = vst [vmem:[%s139 + $0xc8] sm:$0xff] %v524
        %583 = vst [vmem:[%s139 + $0xd0] sm:$0xff] %v529
        %584 = vst [vmem:[%s139 + $0xd8] sm:$0xff] %v534
        %585 = vst [vmem:[%s139 + $0xe0] sm:$0xff] %v539
        %586 = vst [vmem:[%s139 + $0xe8] sm:$0xff] %v544
        %587 = vst [vmem:[%s139 + $0xf0] sm:$0xff] %v549
        %588 = vst [vmem:[%s139 + $0xf8] sm:$0xff] %v554
        %s589 = sand.u32 %s71, 1
        %s590 = scalar_lea.sflag [#allocation3], %s589
        %s591 = sand.u32 %s71, 1
        %s592 = smul.addr %s591, 256
        %s593 = scalar_lea.vmem [#allocation2], %s592
        // Predicated region
        $region29: #{tpu_custom_call.1} parent=27 // pred_check
          %p594 = pneg %p81
        $region30: #{tpu_custom_call.1} parent=27 // pred_check_branch
          %596 = sbr.rel (%p594) target = $region32
        $region31: #{tpu_custom_call.1} parent=27 // pred_region
          %s597 = smul.u32 32, %s16
          %s599 = ssub.s32 4096, 4096
          %600 = vsyncadd %s590, %s599
          %s601 = smul.addr %s597, 128
          %s602 = scalar_lea.hbm %s2, %s601
          %s603 = sshll.u32 %s593, 4
          %s604 = int_to_ptr.vmem [resolvable:$true] %s603
          %609 = dma.vmem_to_hbm [thread:$0]  %s604, 4096, %s602, %s590, 128, 128, 8
        $region32: #{tpu_custom_call.1} parent=27 // pred_fallthru
          _
      $region28: #{tpu_custom_call.1} parent=5 // pred_fallthru
        _
      %p610 = scmp.le.s32.totalorder 2, %s11
      // Predicated region
      $region33: #{tpu_custom_call.1} parent=5 // pred_check
        %p611 = pneg %p610
      $region34: #{tpu_custom_call.1} parent=5 // pred_check_branch
        %613 = sbr.rel (%p611) target = $region36
      $region35: #{tpu_custom_call.1} parent=5 // pred_region
        %s614 = ssub.s32 %s11, 2
        // Predicated region
        $region37: #{tpu_custom_call.1} parent=35 // pred_check
          %p615 = pneg %p87
        $region38: #{tpu_custom_call.1} parent=35 // pred_check_branch
          %617 = sbr.rel (%p615) target = $region40
        $region39: #{tpu_custom_call.1} parent=35 // pred_region
          %s618 = sand.u32 %s72, 1
          %s619 = scalar_lea.sflag [#allocation3], %s618
          %s620 = sand.u32 %s72, 1
          %s621 = smul.addr %s620, 256
          %s622 = scalar_lea.vmem [#allocation2], %s621
          %623 = dma.done %s619, 4096
        $region40: #{tpu_custom_call.1} parent=35 // pred_fallthru
          _
      $region36: #{tpu_custom_call.1} parent=5 // pred_fallthru
        _
    $region6: #{tpu_custom_call.1} parent=1 // loop_footer
      %s15 = sadd.s32 1, %s11
    $region7: #{tpu_custom_call.1} parent=1 // loop_footer_branch
      %10 = sbr.rel target = $region3
    $region8: #{tpu_custom_call.1} parent=1 // loop_exit
      _
    %624 = vsyncpa [#allocation3], 1
    %s625 = scalar_lea.sflag [#allocation3], 1
    %626 = vsyncpa %s625, 1

</llo_original>
